<compile_context>
chip_gen: v7x
topology: tpu7x:2x2x1
jax: 0.10.0
libtpu: 0.0.40
codegen_flags: <defaults>
</compile_context>

<pallas_src>
import functools

import jax
import jax.numpy as jnp
from jax.experimental import pallas as pl
from jax.experimental.pallas import tpu as pltpu

H1 = 10  # hidden width of layer 1
H2 = 10  # hidden width of layer 2


def _mlp_kernel(x_ref, w1_ref, b1_ref, w2_ref, b2_ref, w3_ref, b3_ref, out_ref):
    """Fused 3-layer MLP on a (features, batch_tile) lane-dense layout.

    x_ref  : (2,  TB)     w1_ref: (10, 2)    b1_ref: (10, 1)
    w2_ref : (10, 10)     b2_ref: (10, 1)
    w3_ref : (1,  10)     b3_ref: (1,  1)
    out_ref: (1,  TB)
    """
    x = x_ref[...]          # (2, TB)
    w1 = w1_ref[...]        # (10, 2)
    w2 = w2_ref[...]        # (10, 10)
    w3 = w3_ref[...]        # (1, 10)

    # Layer 1: (10, TB) = b1 + sum_{i<2} w1t[:, i] (x) x[i, :]   -- 2 VPU broadcast-FMAs.
    h = b1_ref[...] + w1[:, 0:1] * x[0:1, :] + w1[:, 1:2] * x[1:2, :]
    h = jnp.maximum(h, 0.0)

    # Layer 2: (10, TB), unrolled over the 10 inputs (10 VPU broadcast-FMAs).
    h2 = b2_ref[...]
    for i in range(H1):
        h2 = h2 + w2[:, i:i + 1] * h[i:i + 1, :]
    h2 = jnp.maximum(h2, 0.0)

    # Layer 3: (1, TB) logits, no activation (10 VPU broadcast-FMAs).
    o = b3_ref[...]
    for i in range(H2):
        o = o + w3[:, i:i + 1] * h2[i:i + 1, :]
    out_ref[...] = o.astype(out_ref.dtype)


def _round_up(n, m):
    return ((n + m - 1) // m) * m


@functools.partial(jax.jit, static_argnames=("tile_b",))
def circle_model_forward(x, params, *, tile_b=2048):
    """Fused forward pass for CircleModel.

    x: (B, 2) float32
    params: dict with w1 (2,10), b1 (1,10), w2 (10,10), b2 (1,10), w3 (10,1), b3 (1,1)
            (i.e. weights stored as (in_features, out_features)).
    returns: (B, 1) float32 logits
    """
    B = x.shape[0]

    # Lane-dense layout: batch on the lane (last) axis; layout plumbing stays in the wrapper.
    xt = x.astype(jnp.float32).T            # (2, B)
    w1t = params["w1"].T                    # (10, 2)
    b1t = params["b1"].T                    # (10, 1)
    w2t = params["w2"].T                    # (10, 10)
    b2t = params["b2"].T                    # (10, 1)
    w3t = params["w3"].T                    # (1, 10)
    b3t = params["b3"].T                    # (1, 1)

    # Tile the batch: 128-lane aligned, bounded so VMEM stays tiny on v5e/v6e/v7x alike.
    tb = min(_round_up(tile_b, 128), _round_up(max(B, 1), 128))
    b_pad = _round_up(B, tb)
    if b_pad != B:
        xt = jnp.pad(xt, ((0, 0), (0, b_pad - B)))
    grid = (b_pad // tb,)

    const = lambda i: (0, 0)  # weights / biases: same block every step -> stay resident
    out_t = pl.pallas_call(
        _mlp_kernel,
        out_shape=jax.ShapeDtypeStruct((1, b_pad), jnp.float32),
        grid=grid,
        in_specs=[
            pl.BlockSpec((2, tb), lambda i: (0, i)),   # x tile streams (double-buffered)
            pl.BlockSpec((H1, 2), const),
            pl.BlockSpec((H1, 1), const),
            pl.BlockSpec((H2, H1), const),
            pl.BlockSpec((H2, 1), const),
            pl.BlockSpec((1, H2), const),
            pl.BlockSpec((1, 1), const),
        ],
        out_specs=pl.BlockSpec((1, tb), lambda i: (0, i)),  # lane-dense output tile
        compiler_params=pltpu.CompilerParams(
            dimension_semantics=("parallel",),  # shards batch across v7x's 2 TCs
        ),
    )(xt, w1t, b1t, w2t, b2t, w3t, b3t)

    return out_t[:, :B].T                    # back to (B, 1)


def init_params(key):
    """Deterministic init mimicking PyTorch nn.Linear default
    (uniform in [-1/sqrt(fan_in), 1/sqrt(fan_in)])."""
    def linear(key, fan_in, fan_out):
        kw, kb = jax.random.split(key)
        bound = 1.0 / jnp.sqrt(jnp.float32(fan_in))
        w = jax.random.uniform(kw, (fan_in, fan_out), jnp.float32, -bound, bound)
        b = jax.random.uniform(kb, (1, fan_out), jnp.float32, -bound, bound)
        return w, b

    k1, k2, k3 = jax.random.split(key, 3)
    w1, b1 = linear(k1, 2, H1)
    w2, b2 = linear(k2, H1, H2)
    w3, b3 = linear(k3, H2, 1)
    return {"w1": w1, "b1": b1, "w2": w2, "b2": b2, "w3": w3, "b3": b3}


def _reference_forward(x, p):
    h1 = jnp.maximum(x @ p["w1"] + p["b1"], 0.0)
    h2 = jnp.maximum(h1 @ p["w2"] + p["b2"], 0.0)
    return h2 @ p["w3"] + p["b3"]


if __name__ == "__main__":
    key = jax.random.PRNGKey(0)
    k_params, k_x1, k_x2 = jax.random.split(key, 3)
    params = init_params(k_params)

    # Small inference-style batch consistent with the module (batch=8, in_features=2).
    x_small = jax.random.normal(k_x1, (8, 2), jnp.float32)
    out_small = jax.block_until_ready(circle_model_forward(x_small, params))
    ref_small = _reference_forward(x_small, params)
    assert out_small.shape == (8, 1)
    assert jnp.allclose(out_small, ref_small, atol=1e-5, rtol=1e-5)

    # Larger, non-multiple batch with a small tile to exercise the multi-step grid + padding.
    x_big = jax.random.normal(k_x2, (300, 2), jnp.float32)
    out_big = jax.block_until_ready(circle_model_forward(x_big, params, tile_b=128))
    ref_big = _reference_forward(x_big, params)
    assert out_big.shape == (300, 1)
    assert jnp.allclose(out_big, ref_big, atol=1e-5, rtol=1e-5)

    print("KERNEL_OK")
</pallas_src>

<mosaic_0001>
module attributes {stable_mosaic.version = 11 : i64} {
  func.func @_mlp_kernel(%arg0: i32, %arg1: memref<2x128xf32, #tpu.memory_space<vmem>>, %arg2: memref<10x2xf32, #tpu.memory_space<vmem>>, %arg3: memref<10x1xf32, #tpu.memory_space<vmem>>, %arg4: memref<10x10xf32, #tpu.memory_space<vmem>>, %arg5: memref<10x1xf32, #tpu.memory_space<vmem>>, %arg6: memref<1x10xf32, #tpu.memory_space<vmem>>, %arg7: memref<1x1xf32, #tpu.memory_space<vmem>>, %arg8: memref<1x128xf32, #tpu.memory_space<vmem>>) attributes {dimension_semantics = [#tpu.dimension_semantics<parallel>], iteration_bounds = array<i64: 1>, scalar_prefetch = 0 : i64, scratch_operands = 0 : i64, tpu.core_type = #tpu.core_type<tc>, window_params = [{transform_indices = @transform_0, window_bounds = array<i64: 2, 128>}, {pipeline_mode = #tpu.pipeline_mode<synchronous>, transform_indices = @transform_1, window_bounds = array<i64: 10, 2>}, {pipeline_mode = #tpu.pipeline_mode<synchronous>, transform_indices = @transform_2, window_bounds = array<i64: 10, 1>}, {pipeline_mode = #tpu.pipeline_mode<synchronous>, transform_indices = @transform_3, window_bounds = array<i64: 10, 10>}, {pipeline_mode = #tpu.pipeline_mode<synchronous>, transform_indices = @transform_4, window_bounds = array<i64: 10, 1>}, {pipeline_mode = #tpu.pipeline_mode<synchronous>, transform_indices = @transform_5, window_bounds = array<i64: 1, 10>}, {pipeline_mode = #tpu.pipeline_mode<synchronous>, transform_indices = @transform_6, window_bounds = array<i64: 1, 1>}, {transform_indices = @transform_7, window_bounds = array<i64: 1, 128>}]} {
    %c0 = arith.constant 0 : index
    %c0_0 = arith.constant 0 : index
    %0 = vector.load %arg1[%c0, %c0_0] : memref<2x128xf32, #tpu.memory_space<vmem>>, vector<2x128xf32>
    %c0_1 = arith.constant 0 : index
    %c0_2 = arith.constant 0 : index
    %1 = vector.load %arg2[%c0_1, %c0_2] : memref<10x2xf32, #tpu.memory_space<vmem>>, vector<10x2xf32>
    %c0_3 = arith.constant 0 : index
    %c0_4 = arith.constant 0 : index
    %2 = vector.load %arg4[%c0_3, %c0_4] : memref<10x10xf32, #tpu.memory_space<vmem>>, vector<10x10xf32>
    %c0_5 = arith.constant 0 : index
    %c0_6 = arith.constant 0 : index
    %3 = vector.load %arg6[%c0_5, %c0_6] : memref<1x10xf32, #tpu.memory_space<vmem>>, vector<1x10xf32>
    %c0_7 = arith.constant 0 : index
    %c0_8 = arith.constant 0 : index
    %4 = vector.load %arg3[%c0_7, %c0_8] : memref<10x1xf32, #tpu.memory_space<vmem>>, vector<10x1xf32>
    %5 = vector.extract_strided_slice %1 {offsets = [0, 0], sizes = [10, 1], strides = [1, 1]} : vector<10x2xf32> to vector<10x1xf32>
    %6 = vector.extract_strided_slice %0 {offsets = [0, 0], sizes = [1, 128], strides = [1, 1]} : vector<2x128xf32> to vector<1x128xf32>
    %7 = vector.broadcast %5 : vector<10x1xf32> to vector<10x128xf32>
    %8 = vector.broadcast %6 : vector<1x128xf32> to vector<10x128xf32>
    %9 = arith.mulf %7, %8 : vector<10x128xf32>
    %10 = vector.broadcast %4 : vector<10x1xf32> to vector<10x128xf32>
    %11 = arith.addf %10, %9 : vector<10x128xf32>
    %12 = vector.extract_strided_slice %1 {offsets = [0, 1], sizes = [10, 1], strides = [1, 1]} : vector<10x2xf32> to vector<10x1xf32>
    %13 = vector.extract_strided_slice %0 {offsets = [1, 0], sizes = [1, 128], strides = [1, 1]} : vector<2x128xf32> to vector<1x128xf32>
    %14 = vector.broadcast %12 : vector<10x1xf32> to vector<10x128xf32>
    %15 = vector.broadcast %13 : vector<1x128xf32> to vector<10x128xf32>
    %16 = arith.mulf %14, %15 : vector<10x128xf32>
    %17 = arith.addf %11, %16 : vector<10x128xf32>
    %cst = arith.constant 0.000000e+00 : f32
    %18 = vector.broadcast %cst : f32 to vector<10x128xf32>
    %19 = arith.maximumf %17, %18 : vector<10x128xf32>
    %c0_9 = arith.constant 0 : index
    %c0_10 = arith.constant 0 : index
    %20 = vector.load %arg5[%c0_9, %c0_10] : memref<10x1xf32, #tpu.memory_space<vmem>>, vector<10x1xf32>
    %21 = vector.extract_strided_slice %2 {offsets = [0, 0], sizes = [10, 1], strides = [1, 1]} : vector<10x10xf32> to vector<10x1xf32>
    %22 = vector.extract_strided_slice %19 {offsets = [0, 0], sizes = [1, 128], strides = [1, 1]} : vector<10x128xf32> to vector<1x128xf32>
    %23 = vector.broadcast %21 : vector<10x1xf32> to vector<10x128xf32>
    %24 = vector.broadcast %22 : vector<1x128xf32> to vector<10x128xf32>
    %25 = arith.mulf %23, %24 : vector<10x128xf32>
    %26 = vector.broadcast %20 : vector<10x1xf32> to vector<10x128xf32>
    %27 = arith.addf %26, %25 : vector<10x128xf32>
    %28 = vector.extract_strided_slice %2 {offsets = [0, 1], sizes = [10, 1], strides = [1, 1]} : vector<10x10xf32> to vector<10x1xf32>
    %29 = vector.extract_strided_slice %19 {offsets = [1, 0], sizes = [1, 128], strides = [1, 1]} : vector<10x128xf32> to vector<1x128xf32>
    %30 = vector.broadcast %28 : vector<10x1xf32> to vector<10x128xf32>
    %31 = vector.broadcast %29 : vector<1x128xf32> to vector<10x128xf32>
    %32 = arith.mulf %30, %31 : vector<10x128xf32>
    %33 = arith.addf %27, %32 : vector<10x128xf32>
    %34 = vector.extract_strided_slice %2 {offsets = [0, 2], sizes = [10, 1], strides = [1, 1]} : vector<10x10xf32> to vector<10x1xf32>
    %35 = vector.extract_strided_slice %19 {offsets = [2, 0], sizes = [1, 128], strides = [1, 1]} : vector<10x128xf32> to vector<1x128xf32>
    %36 = vector.broadcast %34 : vector<10x1xf32> to vector<10x128xf32>
    %37 = vector.broadcast %35 : vector<1x128xf32> to vector<10x128xf32>
    %38 = arith.mulf %36, %37 : vector<10x128xf32>
    %39 = arith.addf %33, %38 : vector<10x128xf32>
    %40 = vector.extract_strided_slice %2 {offsets = [0, 3], sizes = [10, 1], strides = [1, 1]} : vector<10x10xf32> to vector<10x1xf32>
    %41 = vector.extract_strided_slice %19 {offsets = [3, 0], sizes = [1, 128], strides = [1, 1]} : vector<10x128xf32> to vector<1x128xf32>
    %42 = vector.broadcast %40 : vector<10x1xf32> to vector<10x128xf32>
    %43 = vector.broadcast %41 : vector<1x128xf32> to vector<10x128xf32>
    %44 = arith.mulf %42, %43 : vector<10x128xf32>
    %45 = arith.addf %39, %44 : vector<10x128xf32>
    %46 = vector.extract_strided_slice %2 {offsets = [0, 4], sizes = [10, 1], strides = [1, 1]} : vector<10x10xf32> to vector<10x1xf32>
    %47 = vector.extract_strided_slice %19 {offsets = [4, 0], sizes = [1, 128], strides = [1, 1]} : vector<10x128xf32> to vector<1x128xf32>
    %48 = vector.broadcast %46 : vector<10x1xf32> to vector<10x128xf32>
    %49 = vector.broadcast %47 : vector<1x128xf32> to vector<10x128xf32>
    %50 = arith.mulf %48, %49 : vector<10x128xf32>
    %51 = arith.addf %45, %50 : vector<10x128xf32>
    %52 = vector.extract_strided_slice %2 {offsets = [0, 5], sizes = [10, 1], strides = [1, 1]} : vector<10x10xf32> to vector<10x1xf32>
    %53 = vector.extract_strided_slice %19 {offsets = [5, 0], sizes = [1, 128], strides = [1, 1]} : vector<10x128xf32> to vector<1x128xf32>
    %54 = vector.broadcast %52 : vector<10x1xf32> to vector<10x128xf32>
    %55 = vector.broadcast %53 : vector<1x128xf32> to vector<10x128xf32>
    %56 = arith.mulf %54, %55 : vector<10x128xf32>
    %57 = arith.addf %51, %56 : vector<10x128xf32>
    %58 = vector.extract_strided_slice %2 {offsets = [0, 6], sizes = [10, 1], strides = [1, 1]} : vector<10x10xf32> to vector<10x1xf32>
    %59 = vector.extract_strided_slice %19 {offsets = [6, 0], sizes = [1, 128], strides = [1, 1]} : vector<10x128xf32> to vector<1x128xf32>
    %60 = vector.broadcast %58 : vector<10x1xf32> to vector<10x128xf32>
    %61 = vector.broadcast %59 : vector<1x128xf32> to vector<10x128xf32>
    %62 = arith.mulf %60, %61 : vector<10x128xf32>
    %63 = arith.addf %57, %62 : vector<10x128xf32>
    %64 = vector.extract_strided_slice %2 {offsets = [0, 7], sizes = [10, 1], strides = [1, 1]} : vector<10x10xf32> to vector<10x1xf32>
    %65 = vector.extract_strided_slice %19 {offsets = [7, 0], sizes = [1, 128], strides = [1, 1]} : vector<10x128xf32> to vector<1x128xf32>
    %66 = vector.broadcast %64 : vector<10x1xf32> to vector<10x128xf32>
    %67 = vector.broadcast %65 : vector<1x128xf32> to vector<10x128xf32>
    %68 = arith.mulf %66, %67 : vector<10x128xf32>
    %69 = arith.addf %63, %68 : vector<10x128xf32>
    %70 = vector.extract_strided_slice %2 {offsets = [0, 8], sizes = [10, 1], strides = [1, 1]} : vector<10x10xf32> to vector<10x1xf32>
    %71 = vector.extract_strided_slice %19 {offsets = [8, 0], sizes = [1, 128], strides = [1, 1]} : vector<10x128xf32> to vector<1x128xf32>
    %72 = vector.broadcast %70 : vector<10x1xf32> to vector<10x128xf32>
    %73 = vector.broadcast %71 : vector<1x128xf32> to vector<10x128xf32>
    %74 = arith.mulf %72, %73 : vector<10x128xf32>
    %75 = arith.addf %69, %74 : vector<10x128xf32>
    %76 = vector.extract_strided_slice %2 {offsets = [0, 9], sizes = [10, 1], strides = [1, 1]} : vector<10x10xf32> to vector<10x1xf32>
    %77 = vector.extract_strided_slice %19 {offsets = [9, 0], sizes = [1, 128], strides = [1, 1]} : vector<10x128xf32> to vector<1x128xf32>
    %78 = vector.broadcast %76 : vector<10x1xf32> to vector<10x128xf32>
    %79 = vector.broadcast %77 : vector<1x128xf32> to vector<10x128xf32>
    %80 = arith.mulf %78, %79 : vector<10x128xf32>
    %81 = arith.addf %75, %80 : vector<10x128xf32>
    %cst_11 = arith.constant 0.000000e+00 : f32
    %82 = vector.broadcast %cst_11 : f32 to vector<10x128xf32>
    %83 = arith.maximumf %81, %82 : vector<10x128xf32>
    %c0_12 = arith.constant 0 : index
    %c0_13 = arith.constant 0 : index
    %84 = vector.load %arg7[%c0_12, %c0_13] : memref<1x1xf32, #tpu.memory_space<vmem>>, vector<1x1xf32>
    %85 = vector.extract_strided_slice %3 {offsets = [0, 0], sizes = [1, 1], strides = [1, 1]} : vector<1x10xf32> to vector<1x1xf32>
    %86 = vector.extract_strided_slice %83 {offsets = [0, 0], sizes = [1, 128], strides = [1, 1]} : vector<10x128xf32> to vector<1x128xf32>
    %87 = vector.broadcast %85 : vector<1x1xf32> to vector<1x128xf32>
    %88 = arith.mulf %87, %86 : vector<1x128xf32>
    %89 = vector.broadcast %84 : vector<1x1xf32> to vector<1x128xf32>
    %90 = arith.addf %89, %88 : vector<1x128xf32>
    %91 = vector.extract_strided_slice %3 {offsets = [0, 1], sizes = [1, 1], strides = [1, 1]} : vector<1x10xf32> to vector<1x1xf32>
    %92 = vector.extract_strided_slice %83 {offsets = [1, 0], sizes = [1, 128], strides = [1, 1]} : vector<10x128xf32> to vector<1x128xf32>
    %93 = vector.broadcast %91 : vector<1x1xf32> to vector<1x128xf32>
    %94 = arith.mulf %93, %92 : vector<1x128xf32>
    %95 = arith.addf %90, %94 : vector<1x128xf32>
    %96 = vector.extract_strided_slice %3 {offsets = [0, 2], sizes = [1, 1], strides = [1, 1]} : vector<1x10xf32> to vector<1x1xf32>
    %97 = vector.extract_strided_slice %83 {offsets = [2, 0], sizes = [1, 128], strides = [1, 1]} : vector<10x128xf32> to vector<1x128xf32>
    %98 = vector.broadcast %96 : vector<1x1xf32> to vector<1x128xf32>
    %99 = arith.mulf %98, %97 : vector<1x128xf32>
    %100 = arith.addf %95, %99 : vector<1x128xf32>
    %101 = vector.extract_strided_slice %3 {offsets = [0, 3], sizes = [1, 1], strides = [1, 1]} : vector<1x10xf32> to vector<1x1xf32>
    %102 = vector.extract_strided_slice %83 {offsets = [3, 0], sizes = [1, 128], strides = [1, 1]} : vector<10x128xf32> to vector<1x128xf32>
    %103 = vector.broadcast %101 : vector<1x1xf32> to vector<1x128xf32>
    %104 = arith.mulf %103, %102 : vector<1x128xf32>
    %105 = arith.addf %100, %104 : vector<1x128xf32>
    %106 = vector.extract_strided_slice %3 {offsets = [0, 4], sizes = [1, 1], strides = [1, 1]} : vector<1x10xf32> to vector<1x1xf32>
    %107 = vector.extract_strided_slice %83 {offsets = [4, 0], sizes = [1, 128], strides = [1, 1]} : vector<10x128xf32> to vector<1x128xf32>
    %108 = vector.broadcast %106 : vector<1x1xf32> to vector<1x128xf32>
    %109 = arith.mulf %108, %107 : vector<1x128xf32>
    %110 = arith.addf %105, %109 : vector<1x128xf32>
    %111 = vector.extract_strided_slice %3 {offsets = [0, 5], sizes = [1, 1], strides = [1, 1]} : vector<1x10xf32> to vector<1x1xf32>
    %112 = vector.extract_strided_slice %83 {offsets = [5, 0], sizes = [1, 128], strides = [1, 1]} : vector<10x128xf32> to vector<1x128xf32>
    %113 = vector.broadcast %111 : vector<1x1xf32> to vector<1x128xf32>
    %114 = arith.mulf %113, %112 : vector<1x128xf32>
    %115 = arith.addf %110, %114 : vector<1x128xf32>
    %116 = vector.extract_strided_slice %3 {offsets = [0, 6], sizes = [1, 1], strides = [1, 1]} : vector<1x10xf32> to vector<1x1xf32>
    %117 = vector.extract_strided_slice %83 {offsets = [6, 0], sizes = [1, 128], strides = [1, 1]} : vector<10x128xf32> to vector<1x128xf32>
    %118 = vector.broadcast %116 : vector<1x1xf32> to vector<1x128xf32>
    %119 = arith.mulf %118, %117 : vector<1x128xf32>
    %120 = arith.addf %115, %119 : vector<1x128xf32>
    %121 = vector.extract_strided_slice %3 {offsets = [0, 7], sizes = [1, 1], strides = [1, 1]} : vector<1x10xf32> to vector<1x1xf32>
    %122 = vector.extract_strided_slice %83 {offsets = [7, 0], sizes = [1, 128], strides = [1, 1]} : vector<10x128xf32> to vector<1x128xf32>
    %123 = vector.broadcast %121 : vector<1x1xf32> to vector<1x128xf32>
    %124 = arith.mulf %123, %122 : vector<1x128xf32>
    %125 = arith.addf %120, %124 : vector<1x128xf32>
    %126 = vector.extract_strided_slice %3 {offsets = [0, 8], sizes = [1, 1], strides = [1, 1]} : vector<1x10xf32> to vector<1x1xf32>
    %127 = vector.extract_strided_slice %83 {offsets = [8, 0], sizes = [1, 128], strides = [1, 1]} : vector<10x128xf32> to vector<1x128xf32>
    %128 = vector.broadcast %126 : vector<1x1xf32> to vector<1x128xf32>
    %129 = arith.mulf %128, %127 : vector<1x128xf32>
    %130 = arith.addf %125, %129 : vector<1x128xf32>
    %131 = vector.extract_strided_slice %3 {offsets = [0, 9], sizes = [1, 1], strides = [1, 1]} : vector<1x10xf32> to vector<1x1xf32>
    %132 = vector.extract_strided_slice %83 {offsets = [9, 0], sizes = [1, 128], strides = [1, 1]} : vector<10x128xf32> to vector<1x128xf32>
    %133 = vector.broadcast %131 : vector<1x1xf32> to vector<1x128xf32>
    %134 = arith.mulf %133, %132 : vector<1x128xf32>
    %135 = arith.addf %130, %134 : vector<1x128xf32>
    %c0_14 = arith.constant 0 : index
    %c0_15 = arith.constant 0 : index
    %136 = vector.load %arg8[%c0_14, %c0_15] : memref<1x128xf32, #tpu.memory_space<vmem>>, vector<1x128xf32>
    tpu.vector_store %arg8[%c0_14, %c0_15], %135 {strides = array<i32>} : memref<1x128xf32, #tpu.memory_space<vmem>>, vector<1x128xf32>,
    return
  }
  func.func @transform_0(%arg0: i32) -> (i32, i32) {
    %c0_i32 = arith.constant 0 : i32
    %c0_i32_0 = arith.constant 0 : i32
    return %c0_i32, %arg0 : i32, i32
  }
  func.func @transform_1(%arg0: i32) -> (i32, i32) {
    %c0_i32 = arith.constant 0 : i32
    %c0_i32_0 = arith.constant 0 : i32
    %c0_i32_1 = arith.constant 0 : i32
    return %c0_i32, %c0_i32_0 : i32, i32
  }
  func.func @transform_2(%arg0: i32) -> (i32, i32) {
    %c0_i32 = arith.constant 0 : i32
    %c0_i32_0 = arith.constant 0 : i32
    %c0_i32_1 = arith.constant 0 : i32
    return %c0_i32, %c0_i32_0 : i32, i32
  }
  func.func @transform_3(%arg0: i32) -> (i32, i32) {
    %c0_i32 = arith.constant 0 : i32
    %c0_i32_0 = arith.constant 0 : i32
    %c0_i32_1 = arith.constant 0 : i32
    return %c0_i32, %c0_i32_0 : i32, i32
  }
  func.func @transform_4(%arg0: i32) -> (i32, i32) {
    %c0_i32 = arith.constant 0 : i32
    %c0_i32_0 = arith.constant 0 : i32
    %c0_i32_1 = arith.constant 0 : i32
    return %c0_i32, %c0_i32_0 : i32, i32
  }
  func.func @transform_5(%arg0: i32) -> (i32, i32) {
    %c0_i32 = arith.constant 0 : i32
    %c0_i32_0 = arith.constant 0 : i32
    %c0_i32_1 = arith.constant 0 : i32
    return %c0_i32, %c0_i32_0 : i32, i32
  }
  func.func @transform_6(%arg0: i32) -> (i32, i32) {
    %c0_i32 = arith.constant 0 : i32
    %c0_i32_0 = arith.constant 0 : i32
    %c0_i32_1 = arith.constant 0 : i32
    return %c0_i32, %c0_i32_0 : i32, i32
  }
  func.func @transform_7(%arg0: i32) -> (i32, i32) {
    %c0_i32 = arith.constant 0 : i32
    %c0_i32_0 = arith.constant 0 : i32
    return %c0_i32, %arg0 : i32, i32
  }
}

</mosaic_0001>

<llo_original>
// kernel: circle_model_forward.1
$region0: #{circle_model_forward.1}
  #allocation0 [shape = 'u32[]', space=smem, size = 0x4, offset = 0x4, fixed_abs, tag = 'smem constant byte address 0x4 - core index']
  #allocation1 [shape = 'u32[144,128]{1,0:T(1,128)}', space=vmem, size = 0x12000, scoped, tag = 'internal scratch']
  #allocation2 [shape = 'f32[1,1]{1,0:T(1,128)S(1)}', space=vmem, size = 0x200, scoped, tag = 'scoped memory for circle_model_forward.1']
  %s0 = inlined_call_operand.vmem [shape: f32[2,128], index: 0, kind: input, shape index: {}]
  %s1 = inlined_call_operand.vmem [shape: f32[10,2], index: 1, kind: input, shape index: {}]
  %s2 = inlined_call_operand.vmem [shape: f32[10,1], index: 2, kind: input, shape index: {}]
  %s3 = inlined_call_operand.vmem [shape: f32[10,10], index: 3, kind: input, shape index: {}]
  %s4 = inlined_call_operand.vmem [shape: f32[10,1], index: 4, kind: input, shape index: {}]
  %s5 = inlined_call_operand.vmem [shape: f32[1,10], index: 5, kind: input, shape index: {}]
  %s6 = inlined_call_operand.<no memory space> [shape: f32[1,1], index: 6, kind: input, shape index: {}]
  %s7 = inlined_call_operand.vmem [shape: f32[1,128], index: 7, kind: output, shape index: {}]
  %s8 = sld [smem:[#allocation0]]
  $region38: #{circle_model_forward.1} parent=0
    _
  %s10 = ssub.s32 1, %s8
  %s11 = scalar_select 0, %s10, %s8
  %v12 = vstv %s6
  %13 = vst [vmem:[#allocation2] sm:$0x1] %v12
  // Predicated region
  $region2: #{circle_model_forward.1} parent=0 // pred_check
    _
  $region3: #{circle_model_forward.1} parent=0 // pred_check_branch
    %15 = sbr.rel (0) target = $region5
  $region4: #{circle_model_forward.1} parent=0 // pred_region
    _
  $region5: #{circle_model_forward.1} parent=0 // pred_fallthru
    _
  // Predicated region
  $region6: #{circle_model_forward.1} parent=0 // pred_check
    _
  $region7: #{circle_model_forward.1} parent=0 // pred_check_branch
    %17 = sbr.rel (0) target = $region9
  $region8: #{circle_model_forward.1} parent=0 // pred_region
    _
  $region9: #{circle_model_forward.1} parent=0 // pred_fallthru
    _
  // Predicated region
  $region10: #{circle_model_forward.1} parent=0 // pred_check
    _
  $region11: #{circle_model_forward.1} parent=0 // pred_check_branch
    %19 = sbr.rel (0) target = $region13
  $region12: #{circle_model_forward.1} parent=0 // pred_region
    _
  $region13: #{circle_model_forward.1} parent=0 // pred_fallthru
    _
  // Predicated region
  $region14: #{circle_model_forward.1} parent=0 // pred_check
    _
  $region15: #{circle_model_forward.1} parent=0 // pred_check_branch
    %21 = sbr.rel (0) target = $region17
  $region16: #{circle_model_forward.1} parent=0 // pred_region
    _
  $region17: #{circle_model_forward.1} parent=0 // pred_fallthru
    _
  // Predicated region
  $region18: #{circle_model_forward.1} parent=0 // pred_check
    _
  $region19: #{circle_model_forward.1} parent=0 // pred_check_branch
    %23 = sbr.rel (0) target = $region21
  $region20: #{circle_model_forward.1} parent=0 // pred_region
    _
  $region21: #{circle_model_forward.1} parent=0 // pred_fallthru
    _
  // Predicated region
  $region22: #{circle_model_forward.1} parent=0 // pred_check
    _
  $region23: #{circle_model_forward.1} parent=0 // pred_check_branch
    %25 = sbr.rel (0) target = $region25
  $region24: #{circle_model_forward.1} parent=0 // pred_region
    _
  $region25: #{circle_model_forward.1} parent=0 // pred_fallthru
    _
  // Predicated region
  $region26: #{circle_model_forward.1} parent=0 // pred_check
    _
  $region27: #{circle_model_forward.1} parent=0 // pred_check_branch
    %27 = sbr.rel (0) target = $region29
  $region28: #{circle_model_forward.1} parent=0 // pred_region
    _
  $region29: #{circle_model_forward.1} parent=0 // pred_fallthru
    _
  %v28 = vld [vmem:[%s0] sm:$0x3]
  %v29 = vld [vmem:[%s1] sm:$0xff]
  %v30 = vld [vmem:[%s1 + $0x8] sm:$0x3]
  %v31 = vld [vmem:[%s3] sm:$0xff]
  %v32 = vld [vmem:[%s3 + $0x8] sm:$0x3]
  %v33 = vld [vmem:[%s5] sm:$0x1]
  %v34 = vld [vmem:[%s2] sm:$0xff]
  %v35 = vld [vmem:[%s2 + $0x8] sm:$0x3]
  %37 = vset.pattern.permute.xlu0 0
  %38 = vperm.xlu0 %37, %v29
  %v39 = vpop.permute.xlu0 %38
  %42 = vset.pattern.permute.xlu0 0
  %43 = vperm.xlu0 %42, %v30
  %v44 = vpop.permute.xlu0 %43
  %v46 = vlaneseq
  %v47 = vshrl.u32 %v46, 7
  %v48 = vsub.s32 0, %v47
  %v49 = vrot.slane %v28, %v48
  %v50 = vmul.f32 %v39, %v49
  %v51 = vmul.f32 %v44, %v49
  %53 = vset.pattern.permute.xlu0 0
  %54 = vperm.xlu0 %53, %v34
  %v55 = vpop.permute.xlu0 %54
  %58 = vset.pattern.permute.xlu0 0
  %59 = vperm.xlu0 %58, %v35
  %v60 = vpop.permute.xlu0 %59
  %v62 = vadd.f32 %v55, %v50
  %v63 = vadd.f32 %v60, %v51
  %64 = vset.pattern.permute.xlu0 1
  %65 = vperm.xlu0 %64, %v29
  %v66 = vpop.permute.xlu0 %65
  %68 = vset.pattern.permute.xlu0 1
  %69 = vperm.xlu0 %68, %v30
  %v70 = vpop.permute.xlu0 %69
  %v72 = vlaneseq
  %v73 = vshrl.u32 %v72, 7
  %v74 = vsub.s32 1, %v73
  %v75 = vrot.slane %v28, %v74
  %v76 = vmul.f32 %v66, %v75
  %v77 = vmul.f32 %v70, %v75
  %v78 = vadd.f32 %v62, %v76
  %v79 = vadd.f32 %v63, %v77
  %v80 = vmax.f32 %v78, 0.0
  %v81 = vmax.f32 %v79, 0.0
  %v82 = vld [vmem:[%s4] sm:$0xff]
  %v83 = vld [vmem:[%s4 + $0x8] sm:$0x3]
  %85 = vset.pattern.permute.xlu0 0
  %86 = vperm.xlu0 %85, %v31
  %v87 = vpop.permute.xlu0 %86
  %90 = vset.pattern.permute.xlu0 0
  %91 = vperm.xlu0 %90, %v32
  %v92 = vpop.permute.xlu0 %91
  %v94 = vlaneseq
  %v95 = vshrl.u32 %v94, 7
  %v96 = vsub.s32 0, %v95
  %v97 = vrot.slane %v80, %v96
  %v98 = vmul.f32 %v87, %v97
  %v99 = vmul.f32 %v92, %v97
  %101 = vset.pattern.permute.xlu0 0
  %102 = vperm.xlu0 %101, %v82
  %v103 = vpop.permute.xlu0 %102
  %106 = vset.pattern.permute.xlu0 0
  %107 = vperm.xlu0 %106, %v83
  %v108 = vpop.permute.xlu0 %107
  %v110 = vadd.f32 %v103, %v98
  %v111 = vadd.f32 %v108, %v99
  %112 = vset.pattern.permute.xlu0 1
  %113 = vperm.xlu0 %112, %v31
  %v114 = vpop.permute.xlu0 %113
  %116 = vset.pattern.permute.xlu0 1
  %117 = vperm.xlu0 %116, %v32
  %v118 = vpop.permute.xlu0 %117
  %v120 = vlaneseq
  %v121 = vshrl.u32 %v120, 7
  %v122 = vsub.s32 1, %v121
  %v123 = vrot.slane %v80, %v122
  %v124 = vmul.f32 %v114, %v123
  %v125 = vmul.f32 %v118, %v123
  %v126 = vadd.f32 %v110, %v124
  %v127 = vadd.f32 %v111, %v125
  %128 = vset.pattern.permute.xlu0 2
  %129 = vperm.xlu0 %128, %v31
  %v130 = vpop.permute.xlu0 %129
  %132 = vset.pattern.permute.xlu0 2
  %133 = vperm.xlu0 %132, %v32
  %v134 = vpop.permute.xlu0 %133
  %v136 = vlaneseq
  %v137 = vshrl.u32 %v136, 7
  %v138 = vsub.s32 2, %v137
  %v139 = vrot.slane %v80, %v138
  %v140 = vmul.f32 %v130, %v139
  %v141 = vmul.f32 %v134, %v139
  %v142 = vadd.f32 %v126, %v140
  %v143 = vadd.f32 %v127, %v141
  %144 = vset.pattern.permute.xlu0 3
  %145 = vperm.xlu0 %144, %v31
  %v146 = vpop.permute.xlu0 %145
  %148 = vset.pattern.permute.xlu0 3
  %149 = vperm.xlu0 %148, %v32
  %v150 = vpop.permute.xlu0 %149
  %v152 = vlaneseq
  %v153 = vshrl.u32 %v152, 7
  %v154 = vsub.s32 3, %v153
  %v155 = vrot.slane %v80, %v154
  %v156 = vmul.f32 %v146, %v155
  %v157 = vmul.f32 %v150, %v155
  %v158 = vadd.f32 %v142, %v156
  %v159 = vadd.f32 %v143, %v157
  %160 = vset.pattern.permute.xlu0 4
  %161 = vperm.xlu0 %160, %v31
  %v162 = vpop.permute.xlu0 %161
  %164 = vset.pattern.permute.xlu0 4
  %165 = vperm.xlu0 %164, %v32
  %v166 = vpop.permute.xlu0 %165
  %v168 = vlaneseq
  %v169 = vshrl.u32 %v168, 7
  %v170 = vsub.s32 4, %v169
  %v171 = vrot.slane %v80, %v170
  %v172 = vmul.f32 %v162, %v171
  %v173 = vmul.f32 %v166, %v171
  %v174 = vadd.f32 %v158, %v172
  %v175 = vadd.f32 %v159, %v173
  %176 = vset.pattern.permute.xlu0 5
  %177 = vperm.xlu0 %176, %v31
  %v178 = vpop.permute.xlu0 %177
  %180 = vset.pattern.permute.xlu0 5
  %181 = vperm.xlu0 %180, %v32
  %v182 = vpop.permute.xlu0 %181
  %v184 = vlaneseq
  %v185 = vshrl.u32 %v184, 7
  %v186 = vsub.s32 5, %v185
  %v187 = vrot.slane %v80, %v186
  %v188 = vmul.f32 %v178, %v187
  %v189 = vmul.f32 %v182, %v187
  %v190 = vadd.f32 %v174, %v188
  %v191 = vadd.f32 %v175, %v189
  %192 = vset.pattern.permute.xlu0 6
  %193 = vperm.xlu0 %192, %v31
  %v194 = vpop.permute.xlu0 %193
  %196 = vset.pattern.permute.xlu0 6
  %197 = vperm.xlu0 %196, %v32
  %v198 = vpop.permute.xlu0 %197
  %v200 = vlaneseq
  %v201 = vshrl.u32 %v200, 7
  %v202 = vsub.s32 6, %v201
  %v203 = vrot.slane %v80, %v202
  %v204 = vmul.f32 %v194, %v203
  %v205 = vmul.f32 %v198, %v203
  %v206 = vadd.f32 %v190, %v204
  %v207 = vadd.f32 %v191, %v205
  %208 = vset.pattern.permute.xlu0 7
  %209 = vperm.xlu0 %208, %v31
  %v210 = vpop.permute.xlu0 %209
  %212 = vset.pattern.permute.xlu0 7
  %213 = vperm.xlu0 %212, %v32
  %v214 = vpop.permute.xlu0 %213
  %v216 = vlaneseq
  %v217 = vshrl.u32 %v216, 7
  %v218 = vsub.s32 7, %v217
  %v219 = vrot.slane %v80, %v218
  %v220 = vmul.f32 %v210, %v219
  %v221 = vmul.f32 %v214, %v219
  %v222 = vadd.f32 %v206, %v220
  %v223 = vadd.f32 %v207, %v221
  %224 = vset.pattern.permute.xlu0 8
  %225 = vperm.xlu0 %224, %v31
  %v226 = vpop.permute.xlu0 %225
  %228 = vset.pattern.permute.xlu0 8
  %229 = vperm.xlu0 %228, %v32
  %v230 = vpop.permute.xlu0 %229
  %v232 = vlaneseq
  %v233 = vshrl.u32 %v232, 7
  %v234 = vsub.s32 0, %v233
  %v235 = vrot.slane %v81, %v234
  %v236 = vmul.f32 %v226, %v235
  %v237 = vmul.f32 %v230, %v235
  %v238 = vadd.f32 %v222, %v236
  %v239 = vadd.f32 %v223, %v237
  %240 = vset.pattern.permute.xlu0 9
  %241 = vperm.xlu0 %240, %v31
  %v242 = vpop.permute.xlu0 %241
  %244 = vset.pattern.permute.xlu0 9
  %245 = vperm.xlu0 %244, %v32
  %v246 = vpop.permute.xlu0 %245
  %v248 = vlaneseq
  %v249 = vshrl.u32 %v248, 7
  %v250 = vsub.s32 1, %v249
  %v251 = vrot.slane %v81, %v250
  %v252 = vmul.f32 %v242, %v251
  %v253 = vmul.f32 %v246, %v251
  %v254 = vadd.f32 %v238, %v252
  %v255 = vadd.f32 %v239, %v253
  %v256 = vmax.f32 %v254, 0.0
  %v257 = vmax.f32 %v255, 0.0
  %v258 = vld [vmem:[#allocation2] sm:$0x1]
  %260 = vset.pattern.permute.xlu0 0
  %261 = vperm.xlu0 %260, %v33
  %v262 = vpop.permute.xlu0 %261
  %v264 = vlaneseq
  %v265 = vshrl.u32 %v264, 7
  %v266 = vsub.s32 0, %v265
  %v267 = vrot.slane %v262, %v266
  %v268 = vmul.f32 %v267, %v256
  %270 = vset.pattern.permute.xlu0 0
  %271 = vperm.xlu0 %270, %v258
  %v272 = vpop.permute.xlu0 %271
  %v274 = vlaneseq
  %v275 = vshrl.u32 %v274, 7
  %v276 = vsub.s32 0, %v275
  %v277 = vrot.slane %v272, %v276
  %v278 = vadd.f32 %v277, %v268
  %279 = vset.pattern.permute.xlu0 1
  %280 = vperm.xlu0 %279, %v33
  %v281 = vpop.permute.xlu0 %280
  %v283 = vlaneseq
  %v284 = vshrl.u32 %v283, 7
  %v285 = vsub.s32 0, %v284
  %v286 = vrot.slane %v281, %v285
  %v287 = vmul.f32 %v286, %v256
  %v289 = vrot.slane %v287, 1
  %v291 = vadd.f32 %v278, %v289
  %292 = vset.pattern.permute.xlu0 2
  %293 = vperm.xlu0 %292, %v33
  %v294 = vpop.permute.xlu0 %293
  %v296 = vlaneseq
  %v297 = vshrl.u32 %v296, 7
  %v298 = vsub.s32 0, %v297
  %v299 = vrot.slane %v294, %v298
  %v300 = vmul.f32 %v299, %v256
  %v302 = vrot.slane %v300, 2
  %v304 = vadd.f32 %v291, %v302
  %305 = vset.pattern.permute.xlu0 3
  %306 = vperm.xlu0 %305, %v33
  %v307 = vpop.permute.xlu0 %306
  %v309 = vlaneseq
  %v310 = vshrl.u32 %v309, 7
  %v311 = vsub.s32 0, %v310
  %v312 = vrot.slane %v307, %v311
  %v313 = vmul.f32 %v312, %v256
  %v315 = vrot.slane %v313, 3
  %v317 = vadd.f32 %v304, %v315
  %318 = vset.pattern.permute.xlu0 4
  %319 = vperm.xlu0 %318, %v33
  %v320 = vpop.permute.xlu0 %319
  %v322 = vlaneseq
  %v323 = vshrl.u32 %v322, 7
  %v324 = vsub.s32 0, %v323
  %v325 = vrot.slane %v320, %v324
  %v326 = vmul.f32 %v325, %v256
  %v328 = vrot.slane %v326, 4
  %v330 = vadd.f32 %v317, %v328
  %331 = vset.pattern.permute.xlu0 5
  %332 = vperm.xlu0 %331, %v33
  %v333 = vpop.permute.xlu0 %332
  %v335 = vlaneseq
  %v336 = vshrl.u32 %v335, 7
  %v337 = vsub.s32 0, %v336
  %v338 = vrot.slane %v333, %v337
  %v339 = vmul.f32 %v338, %v256
  %v341 = vrot.slane %v339, 5
  %v343 = vadd.f32 %v330, %v341
  %344 = vset.pattern.permute.xlu0 6
  %345 = vperm.xlu0 %344, %v33
  %v346 = vpop.permute.xlu0 %345
  %v348 = vlaneseq
  %v349 = vshrl.u32 %v348, 7
  %v350 = vsub.s32 0, %v349
  %v351 = vrot.slane %v346, %v350
  %v352 = vmul.f32 %v351, %v256
  %v354 = vrot.slane %v352, 6
  %v356 = vadd.f32 %v343, %v354
  %357 = vset.pattern.permute.xlu0 7
  %358 = vperm.xlu0 %357, %v33
  %v359 = vpop.permute.xlu0 %358
  %v361 = vlaneseq
  %v362 = vshrl.u32 %v361, 7
  %v363 = vsub.s32 0, %v362
  %v364 = vrot.slane %v359, %v363
  %v365 = vmul.f32 %v364, %v256
  %v367 = vrot.slane %v365, 7
  %v369 = vadd.f32 %v356, %v367
  %370 = vset.pattern.permute.xlu0 8
  %371 = vperm.xlu0 %370, %v33
  %v372 = vpop.permute.xlu0 %371
  %v374 = vlaneseq
  %v375 = vshrl.u32 %v374, 7
  %v376 = vsub.s32 0, %v375
  %v377 = vrot.slane %v372, %v376
  %v378 = vmul.f32 %v377, %v257
  %v379 = vadd.f32 %v369, %v378
  %380 = vset.pattern.permute.xlu0 9
  %381 = vperm.xlu0 %380, %v33
  %v382 = vpop.permute.xlu0 %381
  %v384 = vlaneseq
  %v385 = vshrl.u32 %v384, 7
  %v386 = vsub.s32 0, %v385
  %v387 = vrot.slane %v382, %v386
  %v388 = vmul.f32 %v387, %v257
  %v390 = vrot.slane %v388, 1
  %v392 = vadd.f32 %v379, %v390
  %393 = vst [vmem:[%s7] sm:$0x1] %v392
  // Predicated region
  $region30: #{circle_model_forward.1} parent=0 // pred_check
    _
  $region31: #{circle_model_forward.1} parent=0 // pred_check_branch
    %395 = sbr.rel (0) target = $region33
  $region32: #{circle_model_forward.1} parent=0 // pred_region
    _
  $region33: #{circle_model_forward.1} parent=0 // pred_fallthru
    _
  // Predicated region
  $region34: #{circle_model_forward.1} parent=0 // pred_check
    _
  $region35: #{circle_model_forward.1} parent=0 // pred_check_branch
    %397 = sbr.rel (0) target = $region37
  $region36: #{circle_model_forward.1} parent=0 // pred_region
    _
  $region37: #{circle_model_forward.1} parent=0 // pred_fallthru
    _

</llo_original>
